<compile_context>
chip_gen: v6e
topology: v6e:2x2x1
jax: 0.10.0
libtpu: 0.0.40
codegen_flags: <defaults>
</compile_context>

<pallas_src>
import jax
import jax.numpy as jnp
from jax.experimental import pallas as pl
from jax.experimental.pallas import tpu as pltpu


def _round_up(x, m):
    return (x + m - 1) // m * m


def _row_align(*dtypes):
    # Second-minor (sublane) alignment: 8 rows for 4-byte, 16 for 2-byte, ...
    a = 8
    for d in dtypes:
        a = max(a, 32 // jnp.dtype(d).itemsize)
    return a


def _pick_tm(m, tm_req, align):
    """Row tile: multiple of `align`, prefer divisors of m (avoids an M-padding
    HBM pass) and prefer >= 2 grid steps so v7x's two TensorCores both work."""
    hi = max(align, min(_round_up(tm_req, align), _round_up(m, align)))
    tm = None
    for cand in range(hi, align - 1, -align):
        if m % cand == 0:
            tm = cand
            break
    if tm is None:
        tm = hi                          # fall back to padding M up to tm
    if (_round_up(m, tm) // tm) < 2:     # degenerate single-step grid
        half = tm // 2
        if half >= align and half % align == 0 and m % half == 0:
            tm = half
    return tm


def _make_kernel(eps, h_real, h_pad, tm, sub_m, matmul_dtype):
    inv_h = 1.0 / h_real
    need_mask = h_pad != h_real
    n_sub = tm // sub_m

    def kernel(h_ref, res_ref, w_ref, p_ref, o_ref):
        # h_ref:   (tm, I)   intermediate activations (native dtype)
        # res_ref: (tm, Hp)  residual input (native dtype)
        # w_ref:   (I, Hp)   dense weight, pre-transposed to (K, N)
        # p_ref:   (8, Hp)   packed f32 constants: row0=bias, row1=gamma, row2=beta
        # o_ref:   (tm, Hp)  output block
        w = w_ref[...]
        bias = p_ref[0:1, :]
        gamma = p_ref[1:2, :]
        beta = p_ref[2:3, :]
        if need_mask:
            col = jax.lax.broadcasted_iota(jnp.int32, (1, h_pad), 1)
            valid = col < h_real

        # Static sub-tile loop -> one basic block; LN tail of sub-tile j can be
        # scheduled under the MXU pushes of sub-tile j+1.
        for j in range(n_sub):
            rows = slice(j * sub_m, (j + 1) * sub_m)
            x = jnp.dot(h_ref[rows, :].astype(matmul_dtype), w,
                        preferred_element_type=jnp.float32)
            x = x + bias + res_ref[rows, :].astype(jnp.float32)

            # Two-pass LayerNorm statistics in f32 (matches the reference form).
            mean = jnp.sum(x, axis=-1, keepdims=True) * inv_h
            d = x - mean
            if need_mask:
                # Padded H columns must not contribute to the variance.
                d = jnp.where(valid, d, 0.0)
            var = jnp.sum(d * d, axis=-1, keepdims=True) * inv_h
            y = d * jax.lax.rsqrt(var + eps) * gamma + beta
            o_ref[rows, :] = y.astype(o_ref.dtype)

    return kernel


def bert_output(hidden_states, input_tensor, weight, bias, gamma, beta,
                eps=1e-12, tm=512, matmul_dtype=jnp.bfloat16, out_dtype=None):
    """Fused dense + (inference) dropout + residual + LayerNorm.

    hidden_states: [B, S, I]   (intermediate activations)
    input_tensor:  [B, S, H]   (residual)
    weight:        [H, I]      (PyTorch nn.Linear convention)
    bias, gamma, beta: [H]
    returns:       [B, S, H]   in `out_dtype` (default: input_tensor.dtype)
    """
    B, S, I = hidden_states.shape
    H = input_tensor.shape[-1]
    M = B * S
    if out_dtype is None:
        out_dtype = input_tensor.dtype

    Hp = _round_up(H, 128)   # lane-dense output stores (no masked vst)
    align = _row_align(hidden_states.dtype, input_tensor.dtype, out_dtype)
    tm = _pick_tm(M, tm, align)
    Mp = _round_up(M, tm)
    sub_m = 128 if tm % 128 == 0 else tm

    # No wrapper-side dtype casts of the big activations: streamed native,
    # cast inside the kernel (avoids an un-fused HBM read+write pass).
    h2d = hidden_states.reshape(M, I)
    r2d = input_tensor.reshape(M, H)
    if Mp != M:
        h2d = jnp.pad(h2d, ((0, Mp - M), (0, 0)))
        r2d = jnp.pad(r2d, ((0, Mp - M), (0, 0)))
    if Hp != H:
        r2d = jnp.pad(r2d, ((0, 0), (0, Hp - H)))

    # One-time weight transpose to (K, N) = (I, Hp); padded N columns are zero.
    w_t = jnp.pad(weight.astype(matmul_dtype).T, ((0, 0), (0, Hp - H)))

    # Pack bias / gamma / beta into a single (8, Hp) f32 constant block.
    params = jnp.zeros((8, Hp), jnp.float32)
    params = params.at[0, :H].set(bias.astype(jnp.float32))
    params = params.at[1, :H].set(gamma.astype(jnp.float32))
    params = params.at[2, :H].set(beta.astype(jnp.float32))

    kernel = _make_kernel(eps, H, Hp, tm, sub_m, matmul_dtype)

    # VMEM budget: weight counted twice (covers the double-buffered fallback),
    # double-buffered streaming tiles, small constants, 25% + 2 MiB slack.
    wb = jnp.dtype(matmul_dtype).itemsize
    est = (2 * Hp * I * wb + 2 * 8 * Hp * 4
           + 2 * tm * I * h2d.dtype.itemsize
           + 2 * tm * Hp * r2d.dtype.itemsize
           + 2 * tm * Hp * jnp.dtype(out_dtype).itemsize)
    try:
        vmem_cap = int(pltpu.get_tpu_info().vmem_capacity_bytes)
    except Exception:
        vmem_cap = 64 << 20                        # conservative (v7x size)
    cap = max(vmem_cap - (8 << 20), 32 << 20)      # headroom for Mosaic scratch
    vmem_limit = int(min(max(est + est // 4 + (2 << 20), 32 << 20), cap))

    def build(single_buffer_consts):
        def const_spec(shape):
            if single_buffer_consts:
                return pl.BlockSpec(shape, lambda i: (0, 0),
                                    pipeline_mode=pl.Buffered(1))
            return pl.BlockSpec(shape, lambda i: (0, 0))

        return pl.pallas_call(
            kernel,
            out_shape=jax.ShapeDtypeStruct((Mp, Hp), out_dtype),
            grid_spec=pltpu.PrefetchScalarGridSpec(
                num_scalar_prefetch=0,
                grid=(Mp // tm,),
                in_specs=[
                    pl.BlockSpec((tm, I), lambda i: (i, 0)),    # intermediate
                    pl.BlockSpec((tm, Hp), lambda i: (i, 0)),   # residual
                    const_spec((I, Hp)),                        # weight (K, N)
                    const_spec((8, Hp)),                        # bias/gamma/beta
                ],
                out_specs=pl.BlockSpec((tm, Hp), lambda i: (i, 0)),
            ),
            compiler_params=pltpu.CompilerParams(
                dimension_semantics=("parallel",),
                vmem_limit_bytes=vmem_limit),
        )

    try:
        out = build(True)(h2d, r2d, w_t, params)
    except Exception:
        # Fallback if pipeline_mode=pl.Buffered(1) is unsupported in this jax:
        # identical kernel, default double-buffered constants.
        out = build(False)(h2d, r2d, w_t, params)

    return out[:M, :H].reshape(B, S, H)


def _reference(hidden_states, input_tensor, weight, bias, gamma, beta,
               eps=1e-12, matmul_dtype=jnp.bfloat16):
    # Same precision policy as the kernel: bf16 matmul operands, f32 accumulate,
    # f32 two-pass LayerNorm.
    x = jnp.dot(hidden_states.astype(matmul_dtype),
                weight.astype(matmul_dtype).T,
                preferred_element_type=jnp.float32)
    x = x + bias.astype(jnp.float32) + input_tensor.astype(jnp.float32)
    mean = jnp.mean(x, axis=-1, keepdims=True)
    var = jnp.mean((x - mean) ** 2, axis=-1, keepdims=True)
    y = (x - mean) * jax.lax.rsqrt(var + eps) * gamma + beta
    return y.astype(input_tensor.dtype)


if __name__ == "__main__":
    # Small BERT-ish config: hidden=32, intermediate=128, batch=2, seq=8.
    B, S, H, I = 2, 8, 32, 128
    eps = 1e-12

    key = jax.random.PRNGKey(0)
    k_h, k_r, k_w, k_b, k_g, k_be = jax.random.split(key, 6)

    hidden_states = jax.random.normal(k_h, (B, S, I), dtype=jnp.float32)
    input_tensor = jax.random.normal(k_r, (B, S, H), dtype=jnp.float32)

    # Deterministic synthetic parameters (not a checkpoint load).
    weight = jax.random.normal(k_w, (H, I), dtype=jnp.float32) * 0.02
    bias = jax.random.normal(k_b, (H,), dtype=jnp.float32) * 0.02
    gamma = 1.0 + 0.1 * jax.random.normal(k_g, (H,), dtype=jnp.float32)
    beta = 0.1 * jax.random.normal(k_be, (H,), dtype=jnp.float32)

    out = bert_output(hidden_states, input_tensor, weight, bias, gamma, beta, eps)
    out = jax.block_until_ready(out)

    ref = _reference(hidden_states, input_tensor, weight, bias, gamma, beta, eps)
    assert out.shape == (B, S, H)
    err = float(jnp.max(jnp.abs(out.astype(jnp.float32) - ref.astype(jnp.float32))))
    assert err < 2e-3, err

    print("KERNEL_OK")
</pallas_src>

<mosaic_0001>
module attributes {stable_mosaic.version = 11 : i64} {
  func.func @kernel(%arg0: i32, %arg1: memref<8x128xf32, #tpu.memory_space<vmem>>, %arg2: memref<8x128xf32, #tpu.memory_space<vmem>>, %arg3: memref<128x128xbf16, #tpu.memory_space<vmem>>, %arg4: memref<8x128xf32, #tpu.memory_space<vmem>>, %arg5: memref<8x128xf32, #tpu.memory_space<vmem>>) attributes {dimension_semantics = [#tpu.dimension_semantics<parallel>], iteration_bounds = array<i64: 2>, scalar_prefetch = 0 : i64, scratch_operands = 0 : i64, tpu.core_type = #tpu.core_type<tc>, window_params = [{transform_indices = @transform_0, window_bounds = array<i64: 8, 128>}, {transform_indices = @transform_1, window_bounds = array<i64: 8, 128>}, {pipeline_mode = #tpu.pipeline_mode<synchronous>, transform_indices = @transform_2, window_bounds = array<i64: 128, 128>}, {pipeline_mode = #tpu.pipeline_mode<synchronous>, transform_indices = @transform_3, window_bounds = array<i64: 8, 128>}, {transform_indices = @transform_4, window_bounds = array<i64: 8, 128>}]} {
    %c0 = arith.constant 0 : index
    %c0_0 = arith.constant 0 : index
    %0 = vector.load %arg3[%c0, %c0_0] : memref<128x128xbf16, #tpu.memory_space<vmem>>, vector<128x128xbf16>
    %c0_1 = arith.constant 0 : index
    %c0_2 = arith.constant 0 : index
    %1 = vector.load %arg4[%c0_1, %c0_2] : memref<8x128xf32, #tpu.memory_space<vmem>>, vector<1x128xf32>
    %c1 = arith.constant 1 : index
    %c0_3 = arith.constant 0 : index
    %2 = vector.load %arg4[%c1, %c0_3] : memref<8x128xf32, #tpu.memory_space<vmem>>, vector<1x128xf32>
    %c2 = arith.constant 2 : index
    %c0_4 = arith.constant 0 : index
    %3 = vector.load %arg4[%c2, %c0_4] : memref<8x128xf32, #tpu.memory_space<vmem>>, vector<1x128xf32>
    %4 = tpu.iota {dimensions = array<i32: 1>} : vector<1x128xi32>
    %c32_i32 = arith.constant 32 : i32
    %5 = vector.broadcast %c32_i32 : i32 to vector<1x128xi32>
    %6 = arith.cmpi slt, %4, %5 : vector<1x128xi32>
    %c0_5 = arith.constant 0 : index
    %c0_6 = arith.constant 0 : index
    %7 = vector.load %arg1[%c0_5, %c0_6] : memref<8x128xf32, #tpu.memory_space<vmem>>, vector<8x128xf32>
    %8 = arith.truncf %7 : vector<8x128xf32> to vector<8x128xbf16>
    %cst = arith.constant dense<0.000000e+00> : vector<8x128xf32>
    %9 = tpu.matmul %8, %0, %cst {dimension_numbers = #tpu.dot_dimension_numbers<[1], [0], [0], [1], [0, 0, 1, 1], [], []>} : vector<8x128xbf16>, vector<128x128xbf16>, vector<8x128xf32> -> vector<8x128xf32>
    %10 = vector.broadcast %1 : vector<1x128xf32> to vector<8x128xf32>
    %11 = arith.addf %9, %10 : vector<8x128xf32>
    %c0_7 = arith.constant 0 : index
    %c0_8 = arith.constant 0 : index
    %12 = vector.load %arg2[%c0_7, %c0_8] : memref<8x128xf32, #tpu.memory_space<vmem>>, vector<8x128xf32>
    %13 = arith.addf %11, %12 : vector<8x128xf32>
    %cst_9 = arith.constant dense<0.000000e+00> : vector<8xf32>
    %14 = vector.multi_reduction <add>, %13, %cst_9 [1] : vector<8x128xf32> to vector<8xf32>
    %15 = vector.shape_cast %14 : vector<8xf32> to vector<8x1xf32>
    %cst_10 = arith.constant 3.125000e-02 : f32
    %16 = vector.broadcast %cst_10 : f32 to vector<8x1xf32>
    %17 = arith.mulf %15, %16 : vector<8x1xf32>
    %18 = vector.broadcast %17 : vector<8x1xf32> to vector<8x128xf32>
    %19 = arith.subf %13, %18 : vector<8x128xf32>
    %cst_11 = arith.constant 0.000000e+00 : f32
    %20 = vector.shape_cast %6 : vector<1x128xi1> to vector<1x128xi1>
    %21 = vector.broadcast %20 : vector<1x128xi1> to vector<8x128xi1>
    %22 = vector.broadcast %cst_11 : f32 to vector<8x128xf32>
    %23 = arith.select %21, %19, %22 : vector<8x128xi1>, vector<8x128xf32>
    %24 = arith.mulf %23, %23 : vector<8x128xf32>
    %cst_12 = arith.constant dense<0.000000e+00> : vector<8xf32>
    %25 = vector.multi_reduction <add>, %24, %cst_12 [1] : vector<8x128xf32> to vector<8xf32>
    %26 = vector.shape_cast %25 : vector<8xf32> to vector<8x1xf32>
    %cst_13 = arith.constant 3.125000e-02 : f32
    %27 = vector.broadcast %cst_13 : f32 to vector<8x1xf32>
    %28 = arith.mulf %26, %27 : vector<8x1xf32>
    %cst_14 = arith.constant 9.99999996E-13 : f32
    %29 = vector.broadcast %cst_14 : f32 to vector<8x1xf32>
    %30 = arith.addf %28, %29 : vector<8x1xf32>
    %31 = math.rsqrt %30 : vector<8x1xf32>
    %32 = vector.broadcast %31 : vector<8x1xf32> to vector<8x128xf32>
    %33 = arith.mulf %23, %32 : vector<8x128xf32>
    %34 = vector.broadcast %2 : vector<1x128xf32> to vector<8x128xf32>
    %35 = arith.mulf %33, %34 : vector<8x128xf32>
    %36 = vector.broadcast %3 : vector<1x128xf32> to vector<8x128xf32>
    %37 = arith.addf %35, %36 : vector<8x128xf32>
    %c0_15 = arith.constant 0 : index
    %c0_16 = arith.constant 0 : index
    %38 = vector.load %arg5[%c0_15, %c0_16] : memref<8x128xf32, #tpu.memory_space<vmem>>, vector<8x128xf32>
    tpu.vector_store %arg5[%c0_15, %c0_16], %37 {strides = array<i32>} : memref<8x128xf32, #tpu.memory_space<vmem>>, vector<8x128xf32>,
    return
  }
  func.func @transform_0(%arg0: i32) -> (i32, i32) {
    %c0_i32 = arith.constant 0 : i32
    %c0_i32_0 = arith.constant 0 : i32
    return %arg0, %c0_i32 : i32, i32
  }
  func.func @transform_1(%arg0: i32) -> (i32, i32) {
    %c0_i32 = arith.constant 0 : i32
    %c0_i32_0 = arith.constant 0 : i32
    return %arg0, %c0_i32 : i32, i32
  }
  func.func @transform_2(%arg0: i32) -> (i32, i32) {
    %c0_i32 = arith.constant 0 : i32
    %c0_i32_0 = arith.constant 0 : i32
    %c0_i32_1 = arith.constant 0 : i32
    return %c0_i32, %c0_i32_0 : i32, i32
  }
  func.func @transform_3(%arg0: i32) -> (i32, i32) {
    %c0_i32 = arith.constant 0 : i32
    %c0_i32_0 = arith.constant 0 : i32
    %c0_i32_1 = arith.constant 0 : i32
    return %c0_i32, %c0_i32_0 : i32, i32
  }
  func.func @transform_4(%arg0: i32) -> (i32, i32) {
    %c0_i32 = arith.constant 0 : i32
    %c0_i32_0 = arith.constant 0 : i32
    return %arg0, %c0_i32 : i32, i32
  }
}

module attributes {stable_mosaic.version = 11 : i64} {
  func.func @kernel(%arg0: i32, %arg1: memref<8x128xf32, #tpu.memory_space<vmem>>, %arg2: memref<8x128xf32, #tpu.memory_space<vmem>>, %arg3: memref<128x128xbf16, #tpu.memory_space<vmem>>, %arg4: memref<8x128xf32, #tpu.memory_space<vmem>>, %arg5: memref<8x128xf32, #tpu.memory_space<vmem>>) attributes {dimension_semantics = [#tpu.dimension_semantics<parallel>], iteration_bounds = array<i64: 2>, scalar_prefetch = 0 : i64, scratch_operands = 0 : i64, tpu.core_type = #tpu.core_type<tc>, window_params = [{transform_indices = @transform_0, window_bounds = array<i64: 8, 128>}, {transform_indices = @transform_1, window_bounds = array<i64: 8, 128>}, {pipeline_mode = #tpu.pipeline_mode<synchronous>, transform_indices = @transform_2, window_bounds = array<i64: 128, 128>}, {pipeline_mode = #tpu.pipeline_mode<synchronous>, transform_indices = @transform_3, window_bounds = array<i64: 8, 128>}, {transform_indices = @transform_4, window_bounds = array<i64: 8, 128>}]} {
    %c0 = arith.constant 0 : index
    %c0_0 = arith.constant 0 : index
    %0 = vector.load %arg3[%c0, %c0_0] : memref<128x128xbf16, #tpu.memory_space<vmem>>, vector<128x128xbf16>
    %c0_1 = arith.constant 0 : index
    %c0_2 = arith.constant 0 : index
    %1 = vector.load %arg4[%c0_1, %c0_2] : memref<8x128xf32, #tpu.memory_space<vmem>>, vector<1x128xf32>
    %c1 = arith.constant 1 : index
    %c0_3 = arith.constant 0 : index
    %2 = vector.load %arg4[%c1, %c0_3] : memref<8x128xf32, #tpu.memory_space<vmem>>, vector<1x128xf32>
    %c2 = arith.constant 2 : index
    %c0_4 = arith.constant 0 : index
    %3 = vector.load %arg4[%c2, %c0_4] : memref<8x128xf32, #tpu.memory_space<vmem>>, vector<1x128xf32>
    %4 = tpu.iota {dimensions = array<i32: 1>} : vector<1x128xi32>
    %c32_i32 = arith.constant 32 : i32
    %5 = vector.broadcast %c32_i32 : i32 to vector<1x128xi32>
    %6 = arith.cmpi slt, %4, %5 : vector<1x128xi32>
    %c0_5 = arith.constant 0 : index
    %c0_6 = arith.constant 0 : index
    %7 = vector.load %arg1[%c0_5, %c0_6] : memref<8x128xf32, #tpu.memory_space<vmem>>, vector<8x128xf32>
    %8 = arith.truncf %7 : vector<8x128xf32> to vector<8x128xbf16>
    %cst = arith.constant dense<0.000000e+00> : vector<8x128xf32>
    %9 = tpu.matmul %8, %0, %cst {dimension_numbers = #tpu.dot_dimension_numbers<[1], [0], [0], [1], [0, 0, 1, 1], [], []>} : vector<8x128xbf16>, vector<128x128xbf16>, vector<8x128xf32> -> vector<8x128xf32>
    %10 = vector.broadcast %1 : vector<1x128xf32> to vector<8x128xf32>
    %11 = arith.addf %9, %10 : vector<8x128xf32>
    %c0_7 = arith.constant 0 : index
    %c0_8 = arith.constant 0 : index
    %12 = vector.load %arg2[%c0_7, %c0_8] : memref<8x128xf32, #tpu.memory_space<vmem>>, vector<8x128xf32>
    %13 = arith.addf %11, %12 : vector<8x128xf32>
    %cst_9 = arith.constant dense<0.000000e+00> : vector<8xf32>
    %14 = vector.multi_reduction <add>, %13, %cst_9 [1] : vector<8x128xf32> to vector<8xf32>
    %15 = vector.shape_cast %14 : vector<8xf32> to vector<8x1xf32>
    %cst_10 = arith.constant 3.125000e-02 : f32
    %16 = vector.broadcast %cst_10 : f32 to vector<8x1xf32>
    %17 = arith.mulf %15, %16 : vector<8x1xf32>
    %18 = vector.broadcast %17 : vector<8x1xf32> to vector<8x128xf32>
    %19 = arith.subf %13, %18 : vector<8x128xf32>
    %cst_11 = arith.constant 0.000000e+00 : f32
    %20 = vector.shape_cast %6 : vector<1x128xi1> to vector<1x128xi1>
    %21 = vector.broadcast %20 : vector<1x128xi1> to vector<8x128xi1>
    %22 = vector.broadcast %cst_11 : f32 to vector<8x128xf32>
    %23 = arith.select %21, %19, %22 : vector<8x128xi1>, vector<8x128xf32>
    %24 = arith.mulf %23, %23 : vector<8x128xf32>
    %cst_12 = arith.constant dense<0.000000e+00> : vector<8xf32>
    %25 = vector.multi_reduction <add>, %24, %cst_12 [1] : vector<8x128xf32> to vector<8xf32>
    %26 = vector.shape_cast %25 : vector<8xf32> to vector<8x1xf32>
    %cst_13 = arith.constant 3.125000e-02 : f32
    %27 = vector.broadcast %cst_13 : f32 to vector<8x1xf32>
    %28 = arith.mulf %26, %27 : vector<8x1xf32>
    %cst_14 = arith.constant 9.99999996E-13 : f32
    %29 = vector.broadcast %cst_14 : f32 to vector<8x1xf32>
    %30 = arith.addf %28, %29 : vector<8x1xf32>
    %31 = math.rsqrt %30 : vector<8x1xf32>
    %32 = vector.broadcast %31 : vector<8x1xf32> to vector<8x128xf32>
    %33 = arith.mulf %23, %32 : vector<8x128xf32>
    %34 = vector.broadcast %2 : vector<1x128xf32> to vector<8x128xf32>
    %35 = arith.mulf %33, %34 : vector<8x128xf32>
    %36 = vector.broadcast %3 : vector<1x128xf32> to vector<8x128xf32>
    %37 = arith.addf %35, %36 : vector<8x128xf32>
    %c0_15 = arith.constant 0 : index
    %c0_16 = arith.constant 0 : index
    %38 = vector.load %arg5[%c0_15, %c0_16] : memref<8x128xf32, #tpu.memory_space<vmem>>, vector<8x128xf32>
    tpu.vector_store %arg5[%c0_15, %c0_16], %37 {strides = array<i32>} : memref<8x128xf32, #tpu.memory_space<vmem>>, vector<8x128xf32>,
    return
  }
  func.func @transform_0(%arg0: i32) -> (i32, i32) {
    %c0_i32 = arith.constant 0 : i32
    %c0_i32_0 = arith.constant 0 : i32
    return %arg0, %c0_i32 : i32, i32
  }
  func.func @transform_1(%arg0: i32) -> (i32, i32) {
    %c0_i32 = arith.constant 0 : i32
    %c0_i32_0 = arith.constant 0 : i32
    return %arg0, %c0_i32 : i32, i32
  }
  func.func @transform_2(%arg0: i32) -> (i32, i32) {
    %c0_i32 = arith.constant 0 : i32
    %c0_i32_0 = arith.constant 0 : i32
    %c0_i32_1 = arith.constant 0 : i32
    return %c0_i32, %c0_i32_0 : i32, i32
  }
  func.func @transform_3(%arg0: i32) -> (i32, i32) {
    %c0_i32 = arith.constant 0 : i32
    %c0_i32_0 = arith.constant 0 : i32
    %c0_i32_1 = arith.constant 0 : i32
    return %c0_i32, %c0_i32_0 : i32, i32
  }
  func.func @transform_4(%arg0: i32) -> (i32, i32) {
    %c0_i32 = arith.constant 0 : i32
    %c0_i32_0 = arith.constant 0 : i32
    return %arg0, %c0_i32 : i32, i32
  }
}

</mosaic_0001>

<llo_original>
// kernel: tpu_custom_call.1
$region0: #{tpu_custom_call.1}
  #allocation0 [shape = 'u32[]', space=smem, size = 0x4, offset = 0x4, fixed_abs, tag = 'smem constant byte address 0x4 - core index']
  #allocation1 [shape = 'u32[144,128]{1,0:T(1,128)}', space=vmem, size = 0x12000, scoped, tag = 'internal scratch']
  %s0 = inlined_call_operand.hbm [shape: f32[16,128], index: 0, kind: input, shape index: {}]
  %s1 = inlined_call_operand.hbm [shape: f32[16,128], index: 1, kind: input, shape index: {}]
  %s2 = inlined_call_operand.hbm [shape: bf16[128,128], index: 2, kind: input, shape index: {}]
  %s3 = inlined_call_operand.hbm [shape: f32[8,128], index: 3, kind: input, shape index: {}]
  %s4 = inlined_call_operand.hbm [shape: f32[16,128], index: 4, kind: output, shape index: {}]
  %s5 = sld [smem:[#allocation0]]
  $region65: #{tpu_custom_call.1} parent=0
    _
  %s7 = ssub.s32 1, %s5
  %s8 = scalar_select 0, %s7, %s5
  $region1: #{tpu_custom_call.1} parent=0
    #allocation2 [shape = 'u8[8192]{0}', space=vmem, size = 0x2000, scoped, tag = 'input window, operand 0']
    #allocation3 [shape = 's32[2]{0}', space=sflag, size = 0x8, scoped, tag = 'scoped memory for tpu_custom_call.1']
    #allocation4 [shape = 's32[2]{0}', space=sflag, size = 0x8, scoped, tag = 'scoped memory for tpu_custom_call.1']
    #allocation5 [shape = 'u8[8192]{0}', space=vmem, size = 0x2000, scoped, tag = 'input window, operand 1']
    #allocation6 [shape = 's32[2]{0}', space=sflag, size = 0x8, scoped, tag = 'scoped memory for tpu_custom_call.1']
    #allocation7 [shape = 'u8[32768]{0}', space=vmem, size = 0x8000, scoped, tag = 'input window, operand 2, single buffered']
    #allocation8 [shape = 'u8[4096]{0}', space=vmem, size = 0x1000, scoped, tag = 'input window, operand 3, single buffered']
    #allocation9 [shape = 's32[1]{0}', space=sflag, size = 0x4, scoped, tag = 'scoped memory for tpu_custom_call.1']
    #allocation10 [shape = 'u8[8192]{0}', space=vmem, size = 0x2000, scoped, tag = 'output window, operand 0']
    %9 = vsyncpa [#allocation3], 0
    %s10 = scalar_lea.sflag [#allocation3], 1
    %11 = vsyncpa %s10, 0
    %12 = vsyncpa [#allocation6], 0
    %s13 = scalar_lea.sflag [#allocation6], 1
    %14 = vsyncpa %s13, 0
    %15 = vsyncpa [#allocation9], 0
    %16 = vsyncpa [#allocation4], 0
    %s17 = scalar_lea.sflag [#allocation4], 1
    %18 = vsyncpa %s17, 0
    loop: start=0, step=1, limit=4
    $region2: #{tpu_custom_call.1} parent=1 // loop_pre_header
      _
    $region3: #{tpu_custom_call.1} parent=1 // loop_header
      %s20 = sphi 0, %s24
      %p21 = scmp.ge.s32.totalorder %s20, 4
      %s30 = sphi 0, %s32
      %s33 = sphi 0, %s30
      %s34 = sphi 0, %s33
      %s50 = sphi 0, %s34
      %s56 = sphi 0, %s58
      %s59 = sphi 0, %s56
      %s60 = sphi 0, %s59
      %s76 = sphi 0, %s60
      %s80 = sphi 0, %s80
      %s82 = sphi 0, %s80
      %s83 = sphi 0, %s82
      %s97 = sphi 0, %s83
      %s101 = sphi 0, %s101
      %s103 = sphi 0, %s101
      %s104 = sphi 0, %s103
      %s118 = sphi 0, %s104
      %s124 = sphi 0, %s126
      %s127 = sphi 0, %s124
      %s128 = sphi 0, %s127
      %s144 = sphi 0, %s128
    $region4: #{tpu_custom_call.1} parent=1 // loop_header_branch
      %23 = sbr.rel (%p21) target = $region8
    $region5: #{tpu_custom_call.1} parent=1 // loop_body
      %s25 = ssub.s32 %s20, 1
      %s26 = ssub.s32 %s20, 2
      %s27 = sadd.s32 %s20, 1
      %s28 = ssub.s32 %s20, %s27
      %p29 = scmp.eq.s32.totalorder %s28, 0
      %s31 = sadd.s32 %s30, 1
      %s32 = scalar_select %p29, %s30, %s31
      %p35 = pneg %p29
      %p36 = scmp.eq.s32.totalorder %s20, 1
      %p37 = por %p35, %p36
      %p38 = scmp.ne.s32.totalorder %s30, %s33
      %p39 = scmp.eq.s32.totalorder %s20, 0
      %p40 = por %p38, %p39
      %p41 = scmp.ne.s32.totalorder %s30, %s33
      %p42 = scmp.eq.s32.totalorder %s25, 1
      %p43 = por %p41, %p42
      %p44 = scmp.ne.s32.totalorder %s33, %s34
      %p45 = scmp.eq.s32.totalorder %s25, 0
      %p46 = por %p44, %p45
      %p47 = scmp.ne.s32.totalorder %s33, %s34
      %p48 = scmp.eq.s32.totalorder %s26, 1
      %p49 = por %p47, %p48
      %p51 = scmp.ne.s32.totalorder %s34, %s50
      %p52 = scmp.eq.s32.totalorder %s26, 0
      %p53 = por %p51, %p52
      %s54 = ssub.s32 %s20, %s27
      %p55 = scmp.eq.s32.totalorder %s54, 0
      %s57 = sadd.s32 %s56, 1
      %s58 = scalar_select %p55, %s56, %s57
      %p61 = pneg %p55
      %p62 = scmp.eq.s32.totalorder %s20, 1
      %p63 = por %p61, %p62
      %p64 = scmp.ne.s32.totalorder %s56, %s59
      %p65 = scmp.eq.s32.totalorder %s20, 0
      %p66 = por %p64, %p65
      %p67 = scmp.ne.s32.totalorder %s56, %s59
      %p68 = scmp.eq.s32.totalorder %s25, 1
      %p69 = por %p67, %p68
      %p70 = scmp.ne.s32.totalorder %s59, %s60
      %p71 = scmp.eq.s32.totalorder %s25, 0
      %p72 = por %p70, %p71
      %p73 = scmp.ne.s32.totalorder %s59, %s60
      %p74 = scmp.eq.s32.totalorder %s26, 1
      %p75 = por %p73, %p74
      %p77 = scmp.ne.s32.totalorder %s60, %s76
      %p78 = scmp.eq.s32.totalorder %s26, 0
      %p79 = por %p77, %p78
      %s81 = sadd.s32 %s80, 1
      %p84 = scmp.eq.s32.totalorder %s20, 1
      %p85 = scmp.ne.s32.totalorder %s80, %s82
      %p86 = scmp.eq.s32.totalorder %s20, 0
      %p87 = por %p85, %p86
      %p88 = scmp.ne.s32.totalorder %s80, %s82
      %p89 = scmp.eq.s32.totalorder %s25, 1
      %p90 = por %p88, %p89
      %p91 = scmp.ne.s32.totalorder %s82, %s83
      %p92 = scmp.eq.s32.totalorder %s25, 0
      %p93 = por %p91, %p92
      %p94 = scmp.ne.s32.totalorder %s82, %s83
      %p95 = scmp.eq.s32.totalorder %s26, 1
      %p96 = por %p94, %p95
      %p98 = scmp.ne.s32.totalorder %s83, %s97
      %p99 = scmp.eq.s32.totalorder %s26, 0
      %p100 = por %p98, %p99
      %s102 = sadd.s32 %s101, 1
      %p105 = scmp.eq.s32.totalorder %s20, 1
      %p106 = scmp.ne.s32.totalorder %s101, %s103
      %p107 = scmp.eq.s32.totalorder %s20, 0
      %p108 = por %p106, %p107
      %p109 = scmp.ne.s32.totalorder %s101, %s103
      %p110 = scmp.eq.s32.totalorder %s25, 1
      %p111 = por %p109, %p110
      %p112 = scmp.ne.s32.totalorder %s103, %s104
      %p113 = scmp.eq.s32.totalorder %s25, 0
      %p114 = por %p112, %p113
      %p115 = scmp.ne.s32.totalorder %s103, %s104
      %p116 = scmp.eq.s32.totalorder %s26, 1
      %p117 = por %p115, %p116
      %p119 = scmp.ne.s32.totalorder %s104, %s118
      %p120 = scmp.eq.s32.totalorder %s26, 0
      %p121 = por %p119, %p120
      %s122 = ssub.s32 %s20, %s27
      %p123 = scmp.eq.s32.totalorder %s122, 0
      %s125 = sadd.s32 %s124, 1
      %s126 = scalar_select %p123, %s124, %s125
      %p129 = pneg %p123
      %p130 = scmp.eq.s32.totalorder %s20, 1
      %p131 = por %p129, %p130
      %p132 = scmp.ne.s32.totalorder %s124, %s127
      %p133 = scmp.eq.s32.totalorder %s20, 0
      %p134 = por %p132, %p133
      %p135 = scmp.ne.s32.totalorder %s124, %s127
      %p136 = scmp.eq.s32.totalorder %s25, 1
      %p137 = por %p135, %p136
      %p138 = scmp.ne.s32.totalorder %s127, %s128
      %p139 = scmp.eq.s32.totalorder %s25, 0
      %p140 = por %p138, %p139
      %p141 = scmp.ne.s32.totalorder %s127, %s128
      %p142 = scmp.eq.s32.totalorder %s26, 1
      %p143 = por %p141, %p142
      %p145 = scmp.ne.s32.totalorder %s128, %s144
      %p146 = scmp.eq.s32.totalorder %s26, 0
      %p147 = por %p145, %p146
      %p148 = scmp.le.s32.totalorder 1, %s20
      %p149 = scmp.lt.s32.totalorder %s20, 3
      %p150 = pnand %p148, %p149
      %p151 = pneg %p150
      // Predicated region
      $region9: #{tpu_custom_call.1} parent=5 // pred_check
        _
      $region10: #{tpu_custom_call.1} parent=5 // pred_check_branch
        %153 = sbr.rel (%p150) target = $region12
      $region11: #{tpu_custom_call.1} parent=5 // pred_region
        %s154 = ssub.s32 %s20, 1
        // Predicated region
        $region13: #{tpu_custom_call.1} parent=11 // pred_check
          %p155 = pneg %p93
        $region14: #{tpu_custom_call.1} parent=11 // pred_check_branch
          %157 = sbr.rel (%p155) target = $region16
        $region15: #{tpu_custom_call.1} parent=11 // pred_region
          %s159 = ssub.s32 1024, 1024
          %160 = vsyncadd [#allocation6], %s159
          %s161 = sshll.u32 [#allocation7], 4
          %s162 = int_to_ptr.vmem [resolvable:$true] %s161
          %167 = dma.hbm_to_vmem [thread:$0]  %s2, 1024, %s162, [#allocation6], 64, 64, 4
        $region16: #{tpu_custom_call.1} parent=11 // pred_fallthru
          _
        // Predicated region
        $region17: #{tpu_custom_call.1} parent=11 // pred_check
          %p168 = pneg %p114
        $region18: #{tpu_custom_call.1} parent=11 // pred_check_branch
          %170 = sbr.rel (%p168) target = $region20
        $region19: #{tpu_custom_call.1} parent=11 // pred_region
          %s172 = ssub.s32 128, 128
          %173 = vsyncadd [#allocation9], %s172
          %s175 = sshll.u32 [#allocation8], 4
          %s176 = int_to_ptr.vmem [resolvable:$true] %s175
          %178 = dma.hbm_to_vmem [thread:$0]  %s3, 128, %s176, [#allocation9]
        $region20: #{tpu_custom_call.1} parent=11 // pred_fallthru
          _
      $region12: #{tpu_custom_call.1} parent=5 // pred_fallthru
        _
      %p179 = scmp.lt.s32.totalorder %s20, 2
      // Predicated region
      $region21: #{tpu_custom_call.1} parent=5 // pred_check
        %p180 = pneg %p179
      $region22: #{tpu_custom_call.1} parent=5 // pred_check_branch
        %182 = sbr.rel (%p180) target = $region24
      $region23: #{tpu_custom_call.1} parent=5 // pred_region
        // Predicated region
        $region25: #{tpu_custom_call.1} parent=23 // pred_check
          %p183 = pneg %p40
        $region26: #{tpu_custom_call.1} parent=23 // pred_check_branch
          %185 = sbr.rel (%p183) target = $region28
        $region27: #{tpu_custom_call.1} parent=23 // pred_region
          %s186 = sand.u32 %s30, 1
          %s187 = scalar_lea.sflag [#allocation3], %s186
          %s188 = sand.u32 %s30, 1
          %s189 = smul.addr %s188, 8
          %s190 = scalar_lea.vmem [#allocation2], %s189
          %s192 = ssub.s32 128, 128
          %193 = vsyncadd %s187, %s192
          %s194 = smul.addr %s20, 128
          %s195 = scalar_lea.hbm %s0, %s194
          %s197 = sshll.u32 %s190, 4
          %s198 = int_to_ptr.vmem [resolvable:$true] %s197
          %200 = dma.hbm_to_vmem [thread:$0]  %s195, 128, %s198, %s187
        $region28: #{tpu_custom_call.1} parent=23 // pred_fallthru
          _
        // Predicated region
        $region29: #{tpu_custom_call.1} parent=23 // pred_check
          %p201 = pneg %p66
        $region30: #{tpu_custom_call.1} parent=23 // pred_check_branch
          %203 = sbr.rel (%p201) target = $region32
        $region31: #{tpu_custom_call.1} parent=23 // pred_region
          %s204 = sand.u32 %s20, 1
          %s205 = scalar_lea.sflag [#allocation6], %s204
          %s206 = sand.u32 %s56, 1
          %s207 = smul.addr %s206, 8
          %s208 = scalar_lea.vmem [#allocation5], %s207
          %s210 = ssub.s32 128, 128
          %211 = vsyncadd %s205, %s210
          %s212 = smul.addr %s20, 128
          %s213 = scalar_lea.hbm %s1, %s212
          %s215 = sshll.u32 %s208, 4
          %s216 = int_to_ptr.vmem [resolvable:$true] %s215
          %218 = dma.hbm_to_vmem [thread:$0]  %s213, 128, %s216, %s205
        $region32: #{tpu_custom_call.1} parent=23 // pred_fallthru
          _
      $region24: #{tpu_custom_call.1} parent=5 // pred_fallthru
        _
      %p219 = scmp.le.s32.totalorder 1, %s20
      %p220 = scmp.lt.s32.totalorder %s20, 3
      %p221 = pnand %p219, %p220
      %p222 = pneg %p221
      // Predicated region
      $region33: #{tpu_custom_call.1} parent=5 // pred_check
        _
      $region34: #{tpu_custom_call.1} parent=5 // pred_check_branch
        %224 = sbr.rel (%p221) target = $region36
      $region35: #{tpu_custom_call.1} parent=5 // pred_region
        %s225 = ssub.s32 %s20, 1
        %s226 = sand.u32 %s33, 1
        %s227 = scalar_lea.sflag [#allocation3], %s226
        %s228 = sand.u32 %s33, 1
        %s229 = smul.addr %s228, 8
        %s230 = scalar_lea.vmem [#allocation2], %s229
        // Predicated region
        $region37: #{tpu_custom_call.1} parent=35 // pred_check
          %p231 = pneg %p46
        $region38: #{tpu_custom_call.1} parent=35 // pred_check_branch
          %233 = sbr.rel (%p231) target = $region40
        $region39: #{tpu_custom_call.1} parent=35 // pred_region
          %234 = dma.done %s227, 128
        $region40: #{tpu_custom_call.1} parent=35 // pred_fallthru
          _
        %s235 = sand.u32 %s25, 1
        %s236 = scalar_lea.sflag [#allocation6], %s235
        %s237 = sand.u32 %s59, 1
        %s238 = smul.addr %s237, 8
        %s239 = scalar_lea.vmem [#allocation5], %s238
        // Predicated region
        $region41: #{tpu_custom_call.1} parent=35 // pred_check
          %p240 = pneg %p72
        $region42: #{tpu_custom_call.1} parent=35 // pred_check_branch
          %242 = sbr.rel (%p240) target = $region44
        $region43: #{tpu_custom_call.1} parent=35 // pred_region
          %243 = dma.done %s236, 128
        $region44: #{tpu_custom_call.1} parent=35 // pred_fallthru
          _
        // Predicated region
        $region45: #{tpu_custom_call.1} parent=35 // pred_check
          %p244 = pneg %p93
        $region46: #{tpu_custom_call.1} parent=35 // pred_check_branch
          %246 = sbr.rel (%p244) target = $region48
        $region47: #{tpu_custom_call.1} parent=35 // pred_region
          %247 = dma.done [#allocation6], 1024
        $region48: #{tpu_custom_call.1} parent=35 // pred_fallthru
          _
        // Predicated region
        $region49: #{tpu_custom_call.1} parent=35 // pred_check
          %p248 = pneg %p114
        $region50: #{tpu_custom_call.1} parent=35 // pred_check_branch
          %250 = sbr.rel (%p248) target = $region52
        $region51: #{tpu_custom_call.1} parent=35 // pred_region
          %251 = dma.done [#allocation9], 128
        $region52: #{tpu_custom_call.1} parent=35 // pred_fallthru
          _
        %s252 = sand.u32 %s33, 1
        %s253 = scalar_lea.sflag [#allocation3], %s252
        %s254 = sand.u32 %s33, 1
        %s255 = smul.addr %s254, 8
        %s256 = scalar_lea.vmem [#allocation2], %s255
        %p257 = pneg %p46
        %p258 = pneg %p43
        %s259 = sand.u32 %s25, 1
        %s260 = scalar_lea.sflag [#allocation6], %s259
        %s261 = sand.u32 %s59, 1
        %s262 = smul.addr %s261, 8
        %s263 = scalar_lea.vmem [#allocation5], %s262
        %p264 = pneg %p72
        %p265 = pneg %p69
        %p266 = pneg %p93
        %p267 = pneg %p90
        %p268 = pneg %p114
        %p269 = pneg %p111
        %p270 = pneg %p140
        %p271 = pneg %p137
        %s272 = sand.u32 %s127, 1
        %s273 = scalar_lea.sflag [#allocation4], %s272
        %s274 = sand.u32 %s127, 1
        %s275 = smul.addr %s274, 8
        %s276 = scalar_lea.vmem [#allocation10], %s275
        %v278 = vld [vmem:[#allocation7] sm:$0xf]
        %v279 = vld [vmem:[#allocation7 + $0x4] sm:$0xf]
        %v280 = vld [vmem:[#allocation7 + $0x8] sm:$0xf]
        %v281 = vld [vmem:[#allocation7 + $0xc] sm:$0xf]
        %v282 = vld [vmem:[#allocation7 + $0x10] sm:$0xf]
        %v283 = vld [vmem:[#allocation7 + $0x14] sm:$0xf]
        %v284 = vld [vmem:[#allocation7 + $0x18] sm:$0xf]
        %v285 = vld [vmem:[#allocation7 + $0x1c] sm:$0xf]
        %v286 = vld [vmem:[#allocation7 + $0x20] sm:$0xf]
        %v287 = vld [vmem:[#allocation7 + $0x24] sm:$0xf]
        %v288 = vld [vmem:[#allocation7 + $0x28] sm:$0xf]
        %v289 = vld [vmem:[#allocation7 + $0x2c] sm:$0xf]
        %v290 = vld [vmem:[#allocation7 + $0x30] sm:$0xf]
        %v291 = vld [vmem:[#allocation7 + $0x34] sm:$0xf]
        %v292 = vld [vmem:[#allocation7 + $0x38] sm:$0xf]
        %v293 = vld [vmem:[#allocation7 + $0x3c] sm:$0xf]
        %v294 = vld [vmem:[#allocation8] sm:$0x1]
        %v295 = vld [vmem:[#allocation8 + $0x1] sm:$0x1]
        %v296 = vld [vmem:[#allocation8 + $0x2] sm:$0x1]
        %v297 = vlaneseq
        %v298 = vand.u32 %v297, 127
        %vm299 = vcmp.lt.s32.totalorder %v298, 32
        %v300 = vld [vmem:[%s230] sm:$0xff]
        %v301 = vpack.c.bf16 %v300, %v300
        %v302 = vlaneseq
        %v303 = vshrl.u32 %v302, 7
        %v304 = vsub.s32 0, %v303
        %v305 = vrot.slane %v294, %v304
        %v322 = vunpack.c.l.b16 %v278
        %v323 = vunpack.c.l.b16 %v279
        %v324 = vunpack.c.l.b16 %v280
        %v325 = vunpack.c.l.b16 %v281
        %v326 = vunpack.c.l.b16 %v282
        %v327 = vunpack.c.l.b16 %v283
        %v328 = vunpack.c.l.b16 %v284
        %v329 = vunpack.c.l.b16 %v285
        %v330 = vunpack.c.l.b16 %v286
        %v331 = vunpack.c.l.b16 %v287
        %v332 = vunpack.c.l.b16 %v288
        %v333 = vunpack.c.l.b16 %v289
        %v334 = vunpack.c.l.b16 %v290
        %v335 = vunpack.c.l.b16 %v291
        %v336 = vunpack.c.l.b16 %v292
        %v337 = vunpack.c.l.b16 %v293
        %v338 = vpack.c.b16 %v323, %v322
        %v339 = vpack.c.b16 %v325, %v324
        %v340 = vpack.c.b16 %v327, %v326
        %v341 = vpack.c.b16 %v329, %v328
        %v342 = vpack.c.b16 %v331, %v330
        %v343 = vpack.c.b16 %v333, %v332
        %v344 = vpack.c.b16 %v335, %v334
        %v345 = vpack.c.b16 %v337, %v336
        %354 = vmatprep.subr.bf16.mxu0 0
        %355 = vmatpush1.bf16.msra.mxu0 %v345
        %356 = vmatprep.subr.bf16.mxu0 0
        %357 = vmatpush1.bf16.msra.mxu0 %v344
        %358 = vmatprep.subr.bf16.mxu0 0
        %359 = vmatpush1.bf16.msra.mxu0 %v343
        %360 = vmatprep.subr.bf16.mxu0 0
        %361 = vmatpush1.bf16.msra.mxu0 %v342
        %362 = vmatprep.subr.bf16.mxu0 0
        %363 = vmatpush1.bf16.msra.mxu0 %v341
        %364 = vmatprep.subr.bf16.mxu0 0
        %365 = vmatpush1.bf16.msra.mxu0 %v340
        %366 = vmatprep.subr.bf16.mxu0 0
        %367 = vmatpush1.bf16.msra.mxu0 %v339
        %368 = vmatprep.subr.bf16.mxu0 0
        %369 = vmatpush1.bf16.msra.mxu0 %v338
        %370 = vmatprep.subr.bf16.mxu0 0
        %371 = vmatpush2.bf16.msra.mxu0 0
        %372 = vmatprep.subr.bf16.mxu0 0
        %373 = vmatpush2.bf16.msra.mxu0 0
        %374 = vmatprep.subr.bf16.mxu0 0
        %375 = vmatpush2.bf16.msra.mxu0 0
        %376 = vmatprep.subr.bf16.mxu0 0
        %377 = vmatpush2.bf16.msra.mxu0 0
        %378 = vmatprep.subr.bf16.mxu0 0
        %379 = vmatpush2.bf16.msra.mxu0 0
        %380 = vmatprep.subr.bf16.mxu0 0
        %381 = vmatpush2.bf16.msra.mxu0 0
        %382 = vmatprep.subr.bf16.mxu0 0
        %383 = vmatpush2.bf16.msra.mxu0 0
        %384 = vmatprep.subr.bf16.mxu0 0
        %385 = vmatpush2.bf16.msra.mxu0 0
        %386 = vmatprep.mubr.bf16.mxu0 0
        %387 = vmatmul.mubr.bf16.gmra.mxu0 %v301
        %v388 = vpop.f32.mrf.mxu0
        %v389 = vadd.f32 %v305, %v388
        %v390 = vpop.f32.mrf.mxu0
        %v391 = vpop.f32.mrf.mxu0
        %v392 = vpop.f32.mrf.mxu0
        %393 = vdwg.mxu0
        %v394 = vld [vmem:[%s239] sm:$0xff]
        %v395 = vadd.f32 %v389, %v394
        %396 = vadd.xlane.f32.xlu0 %v395
        %v397 = vpop.xlane.xlu0 %396
        %v398 = vmul.f32 %v397, 0.03125
        %v399 = vsub.f32 %v395, %v398
        %v400 = vsel %vm299, 1, 0
        %vm401 = vcmp.eq.s32.totalorder %v400, 1
        %v402 = vsel %vm401, %v399, 0.0
        %v403 = vmul.f32 %v402, %v402
        %404 = vadd.xlane.f32.xlu0 %v403
        %v405 = vpop.xlane.xlu0 %404
        %v406 = vmul.f32 %v405, 0.03125
        %v407 = vadd.f32 %v406, 1e-12
        %v408 = vrsqrt.pop %v407
        %v409 = vmul.f32 %v402, %v408
        %v410 = vlaneseq
        %v411 = vshrl.u32 %v410, 7
        %v412 = vsub.s32 0, %v411
        %v413 = vrot.slane %v295, %v412
        %v414 = vmul.f32 %v409, %v413
        %v415 = vlaneseq
        %v416 = vshrl.u32 %v415, 7
        %v417 = vsub.s32 0, %v416
        %v418 = vrot.slane %v296, %v417
        %v419 = vadd.f32 %v414, %v418
        %420 = vst [vmem:[%s276] sm:$0xff] %v419
        %s421 = sand.u32 %s127, 1
        %s422 = scalar_lea.sflag [#allocation4], %s421
        %s423 = sand.u32 %s127, 1
        %s424 = smul.addr %s423, 8
        %s425 = scalar_lea.vmem [#allocation10], %s424
        // Predicated region
        $region53: #{tpu_custom_call.1} parent=35 // pred_check
          %p426 = pneg %p137
        $region54: #{tpu_custom_call.1} parent=35 // pred_check_branch
          %428 = sbr.rel (%p426) target = $region56
        $region55: #{tpu_custom_call.1} parent=35 // pred_region
          %s430 = ssub.s32 128, 128
          %431 = vsyncadd %s422, %s430
          %s432 = smul.addr %s25, 128
          %s433 = scalar_lea.hbm %s4, %s432
          %s435 = sshll.u32 %s425, 4
          %s436 = int_to_ptr.vmem [resolvable:$true] %s435
          %438 = dma.vmem_to_hbm [thread:$0]  %s436, 128, %s433, %s422
        $region56: #{tpu_custom_call.1} parent=35 // pred_fallthru
          _
      $region36: #{tpu_custom_call.1} parent=5 // pred_fallthru
        _
      %p439 = scmp.le.s32.totalorder 2, %s20
      // Predicated region
      $region57: #{tpu_custom_call.1} parent=5 // pred_check
        %p440 = pneg %p439
      $region58: #{tpu_custom_call.1} parent=5 // pred_check_branch
        %442 = sbr.rel (%p440) target = $region60
      $region59: #{tpu_custom_call.1} parent=5 // pred_region
        %s443 = ssub.s32 %s20, 2
        // Predicated region
        $region61: #{tpu_custom_call.1} parent=59 // pred_check
          %p444 = pneg %p143
        $region62: #{tpu_custom_call.1} parent=59 // pred_check_branch
          %446 = sbr.rel (%p444) target = $region64
        $region63: #{tpu_custom_call.1} parent=59 // pred_region
          %s447 = sand.u32 %s128, 1
          %s448 = scalar_lea.sflag [#allocation4], %s447
          %s449 = sand.u32 %s128, 1
          %s450 = smul.addr %s449, 8
          %s451 = scalar_lea.vmem [#allocation10], %s450
          %452 = dma.done %s448, 128
        $region64: #{tpu_custom_call.1} parent=59 // pred_fallthru
          _
      $region60: #{tpu_custom_call.1} parent=5 // pred_fallthru
        _
    $region6: #{tpu_custom_call.1} parent=1 // loop_footer
      %s24 = sadd.s32 1, %s20
    $region7: #{tpu_custom_call.1} parent=1 // loop_footer_branch
      %19 = sbr.rel target = $region3
    $region8: #{tpu_custom_call.1} parent=1 // loop_exit
      _
    %453 = vsyncpa [#allocation3], 1
    %s454 = scalar_lea.sflag [#allocation3], 1
    %455 = vsyncpa %s454, 1
    %456 = vsyncpa [#allocation6], 1
    %s457 = scalar_lea.sflag [#allocation6], 1
    %458 = vsyncpa %s457, 1
    %459 = vsyncpa [#allocation9], 1
    %460 = vsyncpa [#allocation4], 1
    %s461 = scalar_lea.sflag [#allocation4], 1
    %462 = vsyncpa %s461, 1

// kernel: tpu_custom_call.1
$region0: #{tpu_custom_call.1}
  #allocation0 [shape = 'u32[]', space=smem, size = 0x4, offset = 0x4, fixed_abs, tag = 'smem constant byte address 0x4 - core index']
  #allocation1 [shape = 'u32[144,128]{1,0:T(1,128)}', space=vmem, size = 0x12000, scoped, tag = 'internal scratch']
  %s0 = inlined_call_operand.hbm [shape: f32[16,128], index: 0, kind: input, shape index: {}]
  %s1 = inlined_call_operand.hbm [shape: f32[16,128], index: 1, kind: input, shape index: {}]
  %s2 = inlined_call_operand.hbm [shape: bf16[128,128], index: 2, kind: input, shape index: {}]
  %s3 = inlined_call_operand.hbm [shape: f32[8,128], index: 3, kind: input, shape index: {}]
  %s4 = inlined_call_operand.hbm [shape: f32[16,128], index: 4, kind: output, shape index: {}]
  %s5 = sld [smem:[#allocation0]]
  $region65: #{tpu_custom_call.1} parent=0
    _
  %s7 = ssub.s32 1, %s5
  %s8 = scalar_select 0, %s7, %s5
  $region1: #{tpu_custom_call.1} parent=0
    #allocation2 [shape = 'u8[8192]{0}', space=vmem, size = 0x2000, scoped, tag = 'input window, operand 0']
    #allocation3 [shape = 's32[2]{0}', space=sflag, size = 0x8, scoped, tag = 'scoped memory for tpu_custom_call.1']
    #allocation4 [shape = 's32[2]{0}', space=sflag, size = 0x8, scoped, tag = 'scoped memory for tpu_custom_call.1']
    #allocation5 [shape = 'u8[8192]{0}', space=vmem, size = 0x2000, scoped, tag = 'input window, operand 1']
    #allocation6 [shape = 's32[2]{0}', space=sflag, size = 0x8, scoped, tag = 'scoped memory for tpu_custom_call.1']
    #allocation7 [shape = 'u8[32768]{0}', space=vmem, size = 0x8000, scoped, tag = 'input window, operand 2, single buffered']
    #allocation8 [shape = 'u8[4096]{0}', space=vmem, size = 0x1000, scoped, tag = 'input window, operand 3, single buffered']
    #allocation9 [shape = 's32[1]{0}', space=sflag, size = 0x4, scoped, tag = 'scoped memory for tpu_custom_call.1']
    #allocation10 [shape = 'u8[8192]{0}', space=vmem, size = 0x2000, scoped, tag = 'output window, operand 0']
    %9 = vsyncpa [#allocation3], 0
    %s10 = scalar_lea.sflag [#allocation3], 1
    %11 = vsyncpa %s10, 0
    %12 = vsyncpa [#allocation6], 0
    %s13 = scalar_lea.sflag [#allocation6], 1
    %14 = vsyncpa %s13, 0
    %15 = vsyncpa [#allocation9], 0
    %16 = vsyncpa [#allocation4], 0
    %s17 = scalar_lea.sflag [#allocation4], 1
    %18 = vsyncpa %s17, 0
    loop: start=0, step=1, limit=4
    $region2: #{tpu_custom_call.1} parent=1 // loop_pre_header
      _
    $region3: #{tpu_custom_call.1} parent=1 // loop_header
      %s20 = sphi 0, %s24
      %p21 = scmp.ge.s32.totalorder %s20, 4
      %s30 = sphi 0, %s32
      %s33 = sphi 0, %s30
      %s34 = sphi 0, %s33
      %s50 = sphi 0, %s34
      %s56 = sphi 0, %s58
      %s59 = sphi 0, %s56
      %s60 = sphi 0, %s59
      %s76 = sphi 0, %s60
      %s80 = sphi 0, %s80
      %s82 = sphi 0, %s80
      %s83 = sphi 0, %s82
      %s97 = sphi 0, %s83
      %s101 = sphi 0, %s101
      %s103 = sphi 0, %s101
      %s104 = sphi 0, %s103
      %s118 = sphi 0, %s104
      %s124 = sphi 0, %s126
      %s127 = sphi 0, %s124
      %s128 = sphi 0, %s127
      %s144 = sphi 0, %s128
    $region4: #{tpu_custom_call.1} parent=1 // loop_header_branch
      %23 = sbr.rel (%p21) target = $region8
    $region5: #{tpu_custom_call.1} parent=1 // loop_body
      %s25 = ssub.s32 %s20, 1
      %s26 = ssub.s32 %s20, 2
      %s27 = sadd.s32 %s20, 1
      %s28 = ssub.s32 %s20, %s27
      %p29 = scmp.eq.s32.totalorder %s28, 0
      %s31 = sadd.s32 %s30, 1
      %s32 = scalar_select %p29, %s30, %s31
      %p35 = pneg %p29
      %p36 = scmp.eq.s32.totalorder %s20, 1
      %p37 = por %p35, %p36
      %p38 = scmp.ne.s32.totalorder %s30, %s33
      %p39 = scmp.eq.s32.totalorder %s20, 0
      %p40 = por %p38, %p39
      %p41 = scmp.ne.s32.totalorder %s30, %s33
      %p42 = scmp.eq.s32.totalorder %s25, 1
      %p43 = por %p41, %p42
      %p44 = scmp.ne.s32.totalorder %s33, %s34
      %p45 = scmp.eq.s32.totalorder %s25, 0
      %p46 = por %p44, %p45
      %p47 = scmp.ne.s32.totalorder %s33, %s34
      %p48 = scmp.eq.s32.totalorder %s26, 1
      %p49 = por %p47, %p48
      %p51 = scmp.ne.s32.totalorder %s34, %s50
      %p52 = scmp.eq.s32.totalorder %s26, 0
      %p53 = por %p51, %p52
      %s54 = ssub.s32 %s20, %s27
      %p55 = scmp.eq.s32.totalorder %s54, 0
      %s57 = sadd.s32 %s56, 1
      %s58 = scalar_select %p55, %s56, %s57
      %p61 = pneg %p55
      %p62 = scmp.eq.s32.totalorder %s20, 1
      %p63 = por %p61, %p62
      %p64 = scmp.ne.s32.totalorder %s56, %s59
      %p65 = scmp.eq.s32.totalorder %s20, 0
      %p66 = por %p64, %p65
      %p67 = scmp.ne.s32.totalorder %s56, %s59
      %p68 = scmp.eq.s32.totalorder %s25, 1
      %p69 = por %p67, %p68
      %p70 = scmp.ne.s32.totalorder %s59, %s60
      %p71 = scmp.eq.s32.totalorder %s25, 0
      %p72 = por %p70, %p71
      %p73 = scmp.ne.s32.totalorder %s59, %s60
      %p74 = scmp.eq.s32.totalorder %s26, 1
      %p75 = por %p73, %p74
      %p77 = scmp.ne.s32.totalorder %s60, %s76
      %p78 = scmp.eq.s32.totalorder %s26, 0
      %p79 = por %p77, %p78
      %s81 = sadd.s32 %s80, 1
      %p84 = scmp.eq.s32.totalorder %s20, 1
      %p85 = scmp.ne.s32.totalorder %s80, %s82
      %p86 = scmp.eq.s32.totalorder %s20, 0
      %p87 = por %p85, %p86
      %p88 = scmp.ne.s32.totalorder %s80, %s82
      %p89 = scmp.eq.s32.totalorder %s25, 1
      %p90 = por %p88, %p89
      %p91 = scmp.ne.s32.totalorder %s82, %s83
      %p92 = scmp.eq.s32.totalorder %s25, 0
      %p93 = por %p91, %p92
      %p94 = scmp.ne.s32.totalorder %s82, %s83
      %p95 = scmp.eq.s32.totalorder %s26, 1
      %p96 = por %p94, %p95
      %p98 = scmp.ne.s32.totalorder %s83, %s97
      %p99 = scmp.eq.s32.totalorder %s26, 0
      %p100 = por %p98, %p99
      %s102 = sadd.s32 %s101, 1
      %p105 = scmp.eq.s32.totalorder %s20, 1
      %p106 = scmp.ne.s32.totalorder %s101, %s103
      %p107 = scmp.eq.s32.totalorder %s20, 0
      %p108 = por %p106, %p107
      %p109 = scmp.ne.s32.totalorder %s101, %s103
      %p110 = scmp.eq.s32.totalorder %s25, 1
      %p111 = por %p109, %p110
      %p112 = scmp.ne.s32.totalorder %s103, %s104
      %p113 = scmp.eq.s32.totalorder %s25, 0
      %p114 = por %p112, %p113
      %p115 = scmp.ne.s32.totalorder %s103, %s104
      %p116 = scmp.eq.s32.totalorder %s26, 1
      %p117 = por %p115, %p116
      %p119 = scmp.ne.s32.totalorder %s104, %s118
      %p120 = scmp.eq.s32.totalorder %s26, 0
      %p121 = por %p119, %p120
      %s122 = ssub.s32 %s20, %s27
      %p123 = scmp.eq.s32.totalorder %s122, 0
      %s125 = sadd.s32 %s124, 1
      %s126 = scalar_select %p123, %s124, %s125
      %p129 = pneg %p123
      %p130 = scmp.eq.s32.totalorder %s20, 1
      %p131 = por %p129, %p130
      %p132 = scmp.ne.s32.totalorder %s124, %s127
      %p133 = scmp.eq.s32.totalorder %s20, 0
      %p134 = por %p132, %p133
      %p135 = scmp.ne.s32.totalorder %s124, %s127
      %p136 = scmp.eq.s32.totalorder %s25, 1
      %p137 = por %p135, %p136
      %p138 = scmp.ne.s32.totalorder %s127, %s128
      %p139 = scmp.eq.s32.totalorder %s25, 0
      %p140 = por %p138, %p139
      %p141 = scmp.ne.s32.totalorder %s127, %s128
      %p142 = scmp.eq.s32.totalorder %s26, 1
      %p143 = por %p141, %p142
      %p145 = scmp.ne.s32.totalorder %s128, %s144
      %p146 = scmp.eq.s32.totalorder %s26, 0
      %p147 = por %p145, %p146
      %p148 = scmp.le.s32.totalorder 1, %s20
      %p149 = scmp.lt.s32.totalorder %s20, 3
      %p150 = pnand %p148, %p149
      %p151 = pneg %p150
      // Predicated region
      $region9: #{tpu_custom_call.1} parent=5 // pred_check
        _
      $region10: #{tpu_custom_call.1} parent=5 // pred_check_branch
        %153 = sbr.rel (%p150) target = $region12
      $region11: #{tpu_custom_call.1} parent=5 // pred_region
        %s154 = ssub.s32 %s20, 1
        // Predicated region
        $region13: #{tpu_custom_call.1} parent=11 // pred_check
          %p155 = pneg %p93
        $region14: #{tpu_custom_call.1} parent=11 // pred_check_branch
          %157 = sbr.rel (%p155) target = $region16
        $region15: #{tpu_custom_call.1} parent=11 // pred_region
          %s159 = ssub.s32 1024, 1024
          %160 = vsyncadd [#allocation6], %s159
          %s161 = sshll.u32 [#allocation7], 4
          %s162 = int_to_ptr.vmem [resolvable:$true] %s161
          %167 = dma.hbm_to_vmem [thread:$0]  %s2, 1024, %s162, [#allocation6], 64, 64, 4
        $region16: #{tpu_custom_call.1} parent=11 // pred_fallthru
          _
        // Predicated region
        $region17: #{tpu_custom_call.1} parent=11 // pred_check
          %p168 = pneg %p114
        $region18: #{tpu_custom_call.1} parent=11 // pred_check_branch
          %170 = sbr.rel (%p168) target = $region20
        $region19: #{tpu_custom_call.1} parent=11 // pred_region
          %s172 = ssub.s32 128, 128
          %173 = vsyncadd [#allocation9], %s172
          %s175 = sshll.u32 [#allocation8], 4
          %s176 = int_to_ptr.vmem [resolvable:$true] %s175
          %178 = dma.hbm_to_vmem [thread:$0]  %s3, 128, %s176, [#allocation9]
        $region20: #{tpu_custom_call.1} parent=11 // pred_fallthru
          _
      $region12: #{tpu_custom_call.1} parent=5 // pred_fallthru
        _
      %p179 = scmp.lt.s32.totalorder %s20, 2
      // Predicated region
      $region21: #{tpu_custom_call.1} parent=5 // pred_check
        %p180 = pneg %p179
      $region22: #{tpu_custom_call.1} parent=5 // pred_check_branch
        %182 = sbr.rel (%p180) target = $region24
      $region23: #{tpu_custom_call.1} parent=5 // pred_region
        // Predicated region
        $region25: #{tpu_custom_call.1} parent=23 // pred_check
          %p183 = pneg %p40
        $region26: #{tpu_custom_call.1} parent=23 // pred_check_branch
          %185 = sbr.rel (%p183) target = $region28
        $region27: #{tpu_custom_call.1} parent=23 // pred_region
          %s186 = sand.u32 %s30, 1
          %s187 = scalar_lea.sflag [#allocation3], %s186
          %s188 = sand.u32 %s30, 1
          %s189 = smul.addr %s188, 8
          %s190 = scalar_lea.vmem [#allocation2], %s189
          %s192 = ssub.s32 128, 128
          %193 = vsyncadd %s187, %s192
          %s194 = smul.addr %s20, 128
          %s195 = scalar_lea.hbm %s0, %s194
          %s197 = sshll.u32 %s190, 4
          %s198 = int_to_ptr.vmem [resolvable:$true] %s197
          %200 = dma.hbm_to_vmem [thread:$0]  %s195, 128, %s198, %s187
        $region28: #{tpu_custom_call.1} parent=23 // pred_fallthru
          _
        // Predicated region
        $region29: #{tpu_custom_call.1} parent=23 // pred_check
          %p201 = pneg %p66
        $region30: #{tpu_custom_call.1} parent=23 // pred_check_branch
          %203 = sbr.rel (%p201) target = $region32
        $region31: #{tpu_custom_call.1} parent=23 // pred_region
          %s204 = sand.u32 %s20, 1
          %s205 = scalar_lea.sflag [#allocation6], %s204
          %s206 = sand.u32 %s56, 1
          %s207 = smul.addr %s206, 8
          %s208 = scalar_lea.vmem [#allocation5], %s207
          %s210 = ssub.s32 128, 128
          %211 = vsyncadd %s205, %s210
          %s212 = smul.addr %s20, 128
          %s213 = scalar_lea.hbm %s1, %s212
          %s215 = sshll.u32 %s208, 4
          %s216 = int_to_ptr.vmem [resolvable:$true] %s215
          %218 = dma.hbm_to_vmem [thread:$0]  %s213, 128, %s216, %s205
        $region32: #{tpu_custom_call.1} parent=23 // pred_fallthru
          _
      $region24: #{tpu_custom_call.1} parent=5 // pred_fallthru
        _
      %p219 = scmp.le.s32.totalorder 1, %s20
      %p220 = scmp.lt.s32.totalorder %s20, 3
      %p221 = pnand %p219, %p220
      %p222 = pneg %p221
      // Predicated region
      $region33: #{tpu_custom_call.1} parent=5 // pred_check
        _
      $region34: #{tpu_custom_call.1} parent=5 // pred_check_branch
        %224 = sbr.rel (%p221) target = $region36
      $region35: #{tpu_custom_call.1} parent=5 // pred_region
        %s225 = ssub.s32 %s20, 1
        %s226 = sand.u32 %s33, 1
        %s227 = scalar_lea.sflag [#allocation3], %s226
        %s228 = sand.u32 %s33, 1
        %s229 = smul.addr %s228, 8
        %s230 = scalar_lea.vmem [#allocation2], %s229
        // Predicated region
        $region37: #{tpu_custom_call.1} parent=35 // pred_check
          %p231 = pneg %p46
        $region38: #{tpu_custom_call.1} parent=35 // pred_check_branch
          %233 = sbr.rel (%p231) target = $region40
        $region39: #{tpu_custom_call.1} parent=35 // pred_region
          %234 = dma.done %s227, 128
        $region40: #{tpu_custom_call.1} parent=35 // pred_fallthru
          _
        %s235 = sand.u32 %s25, 1
        %s236 = scalar_lea.sflag [#allocation6], %s235
        %s237 = sand.u32 %s59, 1
        %s238 = smul.addr %s237, 8
        %s239 = scalar_lea.vmem [#allocation5], %s238
        // Predicated region
        $region41: #{tpu_custom_call.1} parent=35 // pred_check
          %p240 = pneg %p72
        $region42: #{tpu_custom_call.1} parent=35 // pred_check_branch
          %242 = sbr.rel (%p240) target = $region44
        $region43: #{tpu_custom_call.1} parent=35 // pred_region
          %243 = dma.done %s236, 128
        $region44: #{tpu_custom_call.1} parent=35 // pred_fallthru
          _
        // Predicated region
        $region45: #{tpu_custom_call.1} parent=35 // pred_check
          %p244 = pneg %p93
        $region46: #{tpu_custom_call.1} parent=35 // pred_check_branch
          %246 = sbr.rel (%p244) target = $region48
        $region47: #{tpu_custom_call.1} parent=35 // pred_region
          %247 = dma.done [#allocation6], 1024
        $region48: #{tpu_custom_call.1} parent=35 // pred_fallthru
          _
        // Predicated region
        $region49: #{tpu_custom_call.1} parent=35 // pred_check
          %p248 = pneg %p114
        $region50: #{tpu_custom_call.1} parent=35 // pred_check_branch
          %250 = sbr.rel (%p248) target = $region52
        $region51: #{tpu_custom_call.1} parent=35 // pred_region
          %251 = dma.done [#allocation9], 128
        $region52: #{tpu_custom_call.1} parent=35 // pred_fallthru
          _
        %s252 = sand.u32 %s33, 1
        %s253 = scalar_lea.sflag [#allocation3], %s252
        %s254 = sand.u32 %s33, 1
        %s255 = smul.addr %s254, 8
        %s256 = scalar_lea.vmem [#allocation2], %s255
        %p257 = pneg %p46
        %p258 = pneg %p43
        %s259 = sand.u32 %s25, 1
        %s260 = scalar_lea.sflag [#allocation6], %s259
        %s261 = sand.u32 %s59, 1
        %s262 = smul.addr %s261, 8
        %s263 = scalar_lea.vmem [#allocation5], %s262
        %p264 = pneg %p72
        %p265 = pneg %p69
        %p266 = pneg %p93
        %p267 = pneg %p90
        %p268 = pneg %p114
        %p269 = pneg %p111
        %p270 = pneg %p140
        %p271 = pneg %p137
        %s272 = sand.u32 %s127, 1
        %s273 = scalar_lea.sflag [#allocation4], %s272
        %s274 = sand.u32 %s127, 1
        %s275 = smul.addr %s274, 8
        %s276 = scalar_lea.vmem [#allocation10], %s275
        %v278 = vld [vmem:[#allocation7] sm:$0xf]
        %v279 = vld [vmem:[#allocation7 + $0x4] sm:$0xf]
        %v280 = vld [vmem:[#allocation7 + $0x8] sm:$0xf]
        %v281 = vld [vmem:[#allocation7 + $0xc] sm:$0xf]
        %v282 = vld [vmem:[#allocation7 + $0x10] sm:$0xf]
        %v283 = vld [vmem:[#allocation7 + $0x14] sm:$0xf]
        %v284 = vld [vmem:[#allocation7 + $0x18] sm:$0xf]
        %v285 = vld [vmem:[#allocation7 + $0x1c] sm:$0xf]
        %v286 = vld [vmem:[#allocation7 + $0x20] sm:$0xf]
        %v287 = vld [vmem:[#allocation7 + $0x24] sm:$0xf]
        %v288 = vld [vmem:[#allocation7 + $0x28] sm:$0xf]
        %v289 = vld [vmem:[#allocation7 + $0x2c] sm:$0xf]
        %v290 = vld [vmem:[#allocation7 + $0x30] sm:$0xf]
        %v291 = vld [vmem:[#allocation7 + $0x34] sm:$0xf]
        %v292 = vld [vmem:[#allocation7 + $0x38] sm:$0xf]
        %v293 = vld [vmem:[#allocation7 + $0x3c] sm:$0xf]
        %v294 = vld [vmem:[#allocation8] sm:$0x1]
        %v295 = vld [vmem:[#allocation8 + $0x1] sm:$0x1]
        %v296 = vld [vmem:[#allocation8 + $0x2] sm:$0x1]
        %v297 = vlaneseq
        %v298 = vand.u32 %v297, 127
        %vm299 = vcmp.lt.s32.totalorder %v298, 32
        %v300 = vld [vmem:[%s230] sm:$0xff]
        %v301 = vpack.c.bf16 %v300, %v300
        %v302 = vlaneseq
        %v303 = vshrl.u32 %v302, 7
        %v304 = vsub.s32 0, %v303
        %v305 = vrot.slane %v294, %v304
        %v322 = vunpack.c.l.b16 %v278
        %v323 = vunpack.c.l.b16 %v279
        %v324 = vunpack.c.l.b16 %v280
        %v325 = vunpack.c.l.b16 %v281
        %v326 = vunpack.c.l.b16 %v282
        %v327 = vunpack.c.l.b16 %v283
        %v328 = vunpack.c.l.b16 %v284
        %v329 = vunpack.c.l.b16 %v285
        %v330 = vunpack.c.l.b16 %v286
        %v331 = vunpack.c.l.b16 %v287
        %v332 = vunpack.c.l.b16 %v288
        %v333 = vunpack.c.l.b16 %v289
        %v334 = vunpack.c.l.b16 %v290
        %v335 = vunpack.c.l.b16 %v291
        %v336 = vunpack.c.l.b16 %v292
        %v337 = vunpack.c.l.b16 %v293
        %v338 = vpack.c.b16 %v323, %v322
        %v339 = vpack.c.b16 %v325, %v324
        %v340 = vpack.c.b16 %v327, %v326
        %v341 = vpack.c.b16 %v329, %v328
        %v342 = vpack.c.b16 %v331, %v330
        %v343 = vpack.c.b16 %v333, %v332
        %v344 = vpack.c.b16 %v335, %v334
        %v345 = vpack.c.b16 %v337, %v336
        %354 = vmatprep.subr.bf16.mxu0 0
        %355 = vmatpush1.bf16.msra.mxu0 %v345
        %356 = vmatprep.subr.bf16.mxu0 0
        %357 = vmatpush1.bf16.msra.mxu0 %v344
        %358 = vmatprep.subr.bf16.mxu0 0
        %359 = vmatpush1.bf16.msra.mxu0 %v343
        %360 = vmatprep.subr.bf16.mxu0 0
        %361 = vmatpush1.bf16.msra.mxu0 %v342
        %362 = vmatprep.subr.bf16.mxu0 0
        %363 = vmatpush1.bf16.msra.mxu0 %v341
        %364 = vmatprep.subr.bf16.mxu0 0
        %365 = vmatpush1.bf16.msra.mxu0 %v340
        %366 = vmatprep.subr.bf16.mxu0 0
        %367 = vmatpush1.bf16.msra.mxu0 %v339
        %368 = vmatprep.subr.bf16.mxu0 0
        %369 = vmatpush1.bf16.msra.mxu0 %v338
        %370 = vmatprep.subr.bf16.mxu0 0
        %371 = vmatpush2.bf16.msra.mxu0 0
        %372 = vmatprep.subr.bf16.mxu0 0
        %373 = vmatpush2.bf16.msra.mxu0 0
        %374 = vmatprep.subr.bf16.mxu0 0
        %375 = vmatpush2.bf16.msra.mxu0 0
        %376 = vmatprep.subr.bf16.mxu0 0
        %377 = vmatpush2.bf16.msra.mxu0 0
        %378 = vmatprep.subr.bf16.mxu0 0
        %379 = vmatpush2.bf16.msra.mxu0 0
        %380 = vmatprep.subr.bf16.mxu0 0
        %381 = vmatpush2.bf16.msra.mxu0 0
        %382 = vmatprep.subr.bf16.mxu0 0
        %383 = vmatpush2.bf16.msra.mxu0 0
        %384 = vmatprep.subr.bf16.mxu0 0
        %385 = vmatpush2.bf16.msra.mxu0 0
        %386 = vmatprep.mubr.bf16.mxu0 0
        %387 = vmatmul.mubr.bf16.gmra.mxu0 %v301
        %v388 = vpop.f32.mrf.mxu0
        %v389 = vadd.f32 %v305, %v388
        %v390 = vpop.f32.mrf.mxu0
        %v391 = vpop.f32.mrf.mxu0
        %v392 = vpop.f32.mrf.mxu0
        %393 = vdwg.mxu0
        %v394 = vld [vmem:[%s239] sm:$0xff]
        %v395 = vadd.f32 %v389, %v394
        %396 = vadd.xlane.f32.xlu0 %v395
        %v397 = vpop.xlane.xlu0 %396
        %v398 = vmul.f32 %v397, 0.03125
        %v399 = vsub.f32 %v395, %v398
        %v400 = vsel %vm299, 1, 0
        %vm401 = vcmp.eq.s32.totalorder %v400, 1
        %v402 = vsel %vm401, %v399, 0.0
        %v403 = vmul.f32 %v402, %v402
        %404 = vadd.xlane.f32.xlu0 %v403
        %v405 = vpop.xlane.xlu0 %404
        %v406 = vmul.f32 %v405, 0.03125
        %v407 = vadd.f32 %v406, 1e-12
        %v408 = vrsqrt.pop %v407
        %v409 = vmul.f32 %v402, %v408
        %v410 = vlaneseq
        %v411 = vshrl.u32 %v410, 7
        %v412 = vsub.s32 0, %v411
        %v413 = vrot.slane %v295, %v412
        %v414 = vmul.f32 %v409, %v413
        %v415 = vlaneseq
        %v416 = vshrl.u32 %v415, 7
        %v417 = vsub.s32 0, %v416
        %v418 = vrot.slane %v296, %v417
        %v419 = vadd.f32 %v414, %v418
        %420 = vst [vmem:[%s276] sm:$0xff] %v419
        %s421 = sand.u32 %s127, 1
        %s422 = scalar_lea.sflag [#allocation4], %s421
        %s423 = sand.u32 %s127, 1
        %s424 = smul.addr %s423, 8
        %s425 = scalar_lea.vmem [#allocation10], %s424
        // Predicated region
        $region53: #{tpu_custom_call.1} parent=35 // pred_check
          %p426 = pneg %p137
        $region54: #{tpu_custom_call.1} parent=35 // pred_check_branch
          %428 = sbr.rel (%p426) target = $region56
        $region55: #{tpu_custom_call.1} parent=35 // pred_region
          %s430 = ssub.s32 128, 128
          %431 = vsyncadd %s422, %s430
          %s432 = smul.addr %s25, 128
          %s433 = scalar_lea.hbm %s4, %s432
          %s435 = sshll.u32 %s425, 4
          %s436 = int_to_ptr.vmem [resolvable:$true] %s435
          %438 = dma.vmem_to_hbm [thread:$0]  %s436, 128, %s433, %s422
        $region56: #{tpu_custom_call.1} parent=35 // pred_fallthru
          _
      $region36: #{tpu_custom_call.1} parent=5 // pred_fallthru
        _
      %p439 = scmp.le.s32.totalorder 2, %s20
      // Predicated region
      $region57: #{tpu_custom_call.1} parent=5 // pred_check
        %p440 = pneg %p439
      $region58: #{tpu_custom_call.1} parent=5 // pred_check_branch
        %442 = sbr.rel (%p440) target = $region60
      $region59: #{tpu_custom_call.1} parent=5 // pred_region
        %s443 = ssub.s32 %s20, 2
        // Predicated region
        $region61: #{tpu_custom_call.1} parent=59 // pred_check
          %p444 = pneg %p143
        $region62: #{tpu_custom_call.1} parent=59 // pred_check_branch
          %446 = sbr.rel (%p444) target = $region64
        $region63: #{tpu_custom_call.1} parent=59 // pred_region
          %s447 = sand.u32 %s128, 1
          %s448 = scalar_lea.sflag [#allocation4], %s447
          %s449 = sand.u32 %s128, 1
          %s450 = smul.addr %s449, 8
          %s451 = scalar_lea.vmem [#allocation10], %s450
          %452 = dma.done %s448, 128
        $region64: #{tpu_custom_call.1} parent=59 // pred_fallthru
          _
      $region60: #{tpu_custom_call.1} parent=5 // pred_fallthru
        _
    $region6: #{tpu_custom_call.1} parent=1 // loop_footer
      %s24 = sadd.s32 1, %s20
    $region7: #{tpu_custom_call.1} parent=1 // loop_footer_branch
      %19 = sbr.rel target = $region3
    $region8: #{tpu_custom_call.1} parent=1 // loop_exit
      _
    %453 = vsyncpa [#allocation3], 1
    %s454 = scalar_lea.sflag [#allocation3], 1
    %455 = vsyncpa %s454, 1
    %456 = vsyncpa [#allocation6], 1
    %s457 = scalar_lea.sflag [#allocation6], 1
    %458 = vsyncpa %s457, 1
    %459 = vsyncpa [#allocation9], 1
    %460 = vsyncpa [#allocation4], 1
    %s461 = scalar_lea.sflag [#allocation4], 1
    %462 = vsyncpa %s461, 1

</llo_original>
